<compile_context>
chip_gen: v5e
topology: v5e:2x2
jax: 0.10.0
libtpu: 0.0.40
codegen_flags: <defaults>
</compile_context>

<pallas_src>
import functools

import jax
import jax.numpy as jnp
from jax import lax
from jax.experimental import pallas as pl
from jax.experimental.pallas import tpu as pltpu


def _pick_sub(n):
    """Largest prefix-sum sub-block (<=128, multiple of 8) that divides n; else n."""
    for cand in (128, 64, 32, 16, 8):
        if n % cand == 0:
            return cand
    return n


def _tril(sub, dtype):
    row = lax.broadcasted_iota(jnp.int32, (sub, sub), 0)
    col = lax.broadcasted_iota(jnp.int32, (sub, sub), 1)
    return (col <= row).astype(dtype)


# ----------------------------------------------------------------------------------
# Path A: single pass, whole per-batch slab resident in VMEM.  grid = (B,)
# ----------------------------------------------------------------------------------
def _single_pass_kernel(h_ref, w_ref, b_ref, ctx_ref, scores_ref, *, sub, nsub):
    h = h_ref[...]                                    # (S, H), input dtype
    h32 = h.astype(jnp.float32)
    w_row = w_ref[...].astype(jnp.float32)            # (1, H), resident
    bias = b_ref[0]                                   # f32 scalar from SMEM

    # Linear(H, 1): VPU multiply + lane reduction.
    logits = jnp.sum(h32 * w_row, axis=-1, keepdims=True) + bias      # (S, 1)

    # Softmax over the full (resident) sequence; fold 1/l as -log(l) into the exp.
    m = jnp.max(logits, axis=0, keepdims=True)                        # (1, 1)
    l = jnp.sum(jnp.exp(logits - m), axis=0, keepdims=True)           # (1, 1)
    scores = jnp.exp(logits - (m + jnp.log(l)))                       # (S, 1) f32

    weighted = (scores * h32).astype(h.dtype)                         # (S, H)
    tril = _tril(sub, h.dtype)                                        # (sub, sub)

    if nsub <= 8:
        # Short static loop: fully unrolled, sub-blocks sliced from the value.
        carry = jnp.zeros((1, h.shape[1]), jnp.float32)
        for i in range(nsub):
            blk = weighted[i * sub:(i + 1) * sub, :]
            local = jnp.dot(tril, blk, preferred_element_type=jnp.float32) + carry
            ctx_ref[i * sub:(i + 1) * sub, :] = local.astype(ctx_ref.dtype)
            carry = local[sub - 1:sub, :]
    else:
        # Long scan: stage `weighted` in the ctx output buffer, then run the blocked
        # prefix-sum in place with a (1, H) f32 loop-carried running sum.
        ctx_ref[...] = weighted
        def body(i, carry):
            r0 = pl.multiple_of(i * sub, sub)
            blk = ctx_ref[pl.ds(r0, sub), :]
            local = jnp.dot(tril, blk, preferred_element_type=jnp.float32) + carry
            ctx_ref[pl.ds(r0, sub), :] = local.astype(ctx_ref.dtype)
            return local[sub - 1:sub, :]
        lax.fori_loop(0, nsub, body, jnp.zeros((1, h.shape[1]), jnp.float32))

    scores_ref[...] = scores.astype(scores_ref.dtype)


# ----------------------------------------------------------------------------------
# Path B: two-pass tiled.  grid = (B, 2, S // tS)
#   pass 0: compute + cache logits per tile.
#   pass 1: global softmax stats from the cache, scores, blocked prefix-sum.
# ----------------------------------------------------------------------------------
def _two_pass_kernel(h_ref, w_ref, b_ref, ctx_ref, scores_ref,
                     tril_ref, logits_ref, carry_ref, norm_ref, *, tS, sub, nsub):
    p = pl.program_id(1)      # 0: logits pass, 1: output pass
    s = pl.program_id(2)      # sequence-tile index

    # (Re)build the small (sub, sub) tril once per batch (cheap: sub <= 128).
    @pl.when(jnp.logical_and(p == 0, s == 0))
    def _():
        tril_ref[...] = _tril(sub, tril_ref.dtype)

    # ---------------- pass 0: logits for this tile, cached in VMEM ----------------
    @pl.when(p == 0)
    def _():
        h32 = h_ref[...].astype(jnp.float32)
        w_row = w_ref[...].astype(jnp.float32)
        bias = b_ref[0]
        logits = jnp.sum(h32 * w_row, axis=-1, keepdims=True) + bias   # (tS, 1)
        off = pl.multiple_of(s * tS, tS)
        logits_ref[pl.ds(off, tS), :] = logits

    # ------- pass 1, first step: global softmax normalizer + carry reset ----------
    @pl.when(jnp.logical_and(p == 1, s == 0))
    def _():
        lg = logits_ref[...]                                           # (S, 1) f32
        m = jnp.max(lg, axis=0, keepdims=True)
        l = jnp.sum(jnp.exp(lg - m), axis=0, keepdims=True)
        norm_ref[...] = m + jnp.log(l)            # scores = exp(logits - norm)
        carry_ref[...] = jnp.zeros_like(carry_ref)

    # -------- pass 1: scores, weighted hidden states, blocked prefix-sum ----------
    @pl.when(p == 1)
    def _():
        off = pl.multiple_of(s * tS, tS)
        logits_t = logits_ref[pl.ds(off, tS), :]                       # (tS, 1) f32
        scores = jnp.exp(logits_t - norm_ref[...])                     # (tS, 1) f32

        h = h_ref[...]                                                 # (tS, H)
        weighted = (scores * h.astype(jnp.float32)).astype(h.dtype)
        tril = tril_ref[...]
        carry = carry_ref[...]
        for i in range(nsub):                                          # nsub = tS // sub
            blk = weighted[i * sub:(i + 1) * sub, :]
            local = jnp.dot(tril, blk, preferred_element_type=jnp.float32) + carry
            ctx_ref[i * sub:(i + 1) * sub, :] = local.astype(ctx_ref.dtype)
            carry = local[sub - 1:sub, :]
        carry_ref[...] = carry

        scores_ref[...] = scores.astype(scores_ref.dtype)


# ----------------------------------------------------------------------------------
# Wrapper
# ----------------------------------------------------------------------------------
def attention_layer(hidden_states, weight, bias, *, seq_tile=None):
    """hidden_states: (B, S, H); weight: (H, 1) (= nn.Linear weight.T); bias: (1, 1)."""
    B, S, H = hidden_states.shape
    dtype = hidden_states.dtype
    itemsize = jnp.dtype(dtype).itemsize

    w_row = jnp.asarray(weight, jnp.float32).reshape(1, H)
    b_vec = jnp.asarray(bias, jnp.float32).reshape(1)

    # --- VMEM budget (generation aware; conservative v7x 64 MiB/TC fallback). ---
    try:
        phys = int(pltpu.get_tpu_info().vmem_capacity_bytes)
    except Exception:
        phys = 64 * 1024 * 1024
    vmem_limit = int(phys * 0.80)          # scoped limit we request
    usable = int(vmem_limit * 0.80)        # budget for tiles (headroom for temps/spills)

    out_shapes = (
        jax.ShapeDtypeStruct((B, S, H), dtype),   # context_vector
        jax.ShapeDtypeStruct((B, S, 1), dtype),   # attention_scores
    )

    def single_pass_ws(rows):
        ws = 4 * rows * H * itemsize        # double-buffered hidden in + ctx out
        ws += 3 * rows * H * 4              # f32 temporaries (h32, scores*h, weighted)
        ws += 2 * rows * 128 * itemsize     # scores out blocks (lane-padded)
        ws += 128 * 128 * 4                 # tril
        return ws

    use_single = (seq_tile is None) and (single_pass_ws(S) <= usable)

    if use_single:
        sub = _pick_sub(S)
        nsub = S // sub
        kernel = functools.partial(_single_pass_kernel, sub=sub, nsub=nsub)
        grid_spec = pltpu.PrefetchScalarGridSpec(
            num_scalar_prefetch=0,
            grid=(B,),
            in_specs=[
                pl.BlockSpec((None, S, H), lambda b: (b, 0, 0)),        # full slab
                pl.BlockSpec((1, H), lambda b: (0, 0)),                 # weight row
                pl.BlockSpec(memory_space=pltpu.MemorySpace.SMEM),      # bias scalar
            ],
            out_specs=[
                pl.BlockSpec((None, S, H), lambda b: (b, 0, 0)),
                pl.BlockSpec((None, S, 1), lambda b: (b, 0, 0)),
            ],
        )
        dims = ("parallel",)
        cost = pl.CostEstimate(
            flops=int(B * (2 * S * H + 2 * S * sub * H + 4 * S * H)),
            transcendentals=int(B * S),
            bytes_accessed=int(B * (2 * S * H + S) * itemsize + 4 * (H + 1)),
        )
    else:
        if seq_tile is None:
            seq_tile = None
            for cand in (2048, 1024, 512, 256, 128, 64, 32, 16, 8):
                if S % cand:
                    continue
                ws = 4 * cand * H * itemsize          # in + out double buffers
                ws += 2 * cand * H * 4                # f32 temporaries
                ws += 2 * cand * 128 * itemsize       # scores out blocks (lane-padded)
                ws += 128 * 128 * itemsize            # tril scratch
                ws += S * 128 * 4                     # logits cache (lane-padded (S,1) f32)
                if ws <= usable:
                    seq_tile = cand
                    break
            if seq_tile is None:
                seq_tile = 8 if S % 8 == 0 else S
        assert S % seq_tile == 0, "seq_tile must divide S"
        tS = seq_tile
        nS = S // tS
        sub = _pick_sub(tS)
        nsub = tS // sub
        kernel = functools.partial(_two_pass_kernel, tS=tS, sub=sub, nsub=nsub)
        grid_spec = pltpu.PrefetchScalarGridSpec(
            num_scalar_prefetch=0,
            grid=(B, 2, nS),   # batch, {logits pass, output pass}, sequence tile
            in_specs=[
                pl.BlockSpec((None, tS, H), lambda b, p, s: (b, s, 0)),   # hidden tile
                pl.BlockSpec((1, H), lambda b, p, s: (0, 0)),             # weight row
                pl.BlockSpec(memory_space=pltpu.MemorySpace.SMEM),        # bias scalar
            ],
            out_specs=[
                # During pass 0 nothing is written; map to tile 0 (no spurious writebacks).
                pl.BlockSpec((None, tS, H), lambda b, p, s: (b, s * p, 0)),
                pl.BlockSpec((None, tS, 1), lambda b, p, s: (b, s * p, 0)),
            ],
            scratch_shapes=[
                pltpu.VMEM((sub, sub), dtype),       # tril (built once per batch)
                pltpu.VMEM((S, 1), jnp.float32),     # per-batch logits cache
                pltpu.VMEM((1, H), jnp.float32),     # running cumsum carry
                pltpu.VMEM((1, 1), jnp.float32),     # softmax normalizer m + log(l)
            ],
        )
        dims = ("parallel", "arbitrary", "arbitrary")
        cost = pl.CostEstimate(
            flops=int(B * (2 * S * H + 2 * S * sub * H + 4 * S * H)),
            transcendentals=int(2 * B * S),
            bytes_accessed=int(B * (3 * S * H + S) * itemsize + 4 * (H + 1)),
        )

    return pl.pallas_call(
        kernel,
        out_shape=out_shapes,
        grid_spec=grid_spec,
        compiler_params=pltpu.CompilerParams(
            dimension_semantics=dims,
            vmem_limit_bytes=vmem_limit,
        ),
        cost_estimate=cost,
    )(hidden_states, w_row, b_vec)


def attention_layer_ref(hidden_states, weight, bias):
    """Pure-JAX reference mirroring the PyTorch module."""
    logits = jnp.einsum("bsh,ho->bso", hidden_states, weight) + bias.reshape(())
    scores = jax.nn.softmax(logits, axis=1)
    ctx = jnp.cumsum(scores * hidden_states, axis=1)
    return ctx, scores


if __name__ == "__main__":
    key = jax.random.PRNGKey(0)
    k_x, k_w, k_b, k_x2, k_x3 = jax.random.split(key, 5)

    # Shapes implied by the module: (batch, seq, hidden), hidden_size = 32.
    B, S, H = 2, 8, 32
    hidden_states = jax.random.normal(k_x, (B, S, H), dtype=jnp.float32)
    # nn.Linear(hidden_size, 1): weight (1, H), bias (1,).  We pass weight.T = (H, 1).
    bound = 1.0 / (H ** 0.5)
    weight = jax.random.uniform(k_w, (H, 1), minval=-bound, maxval=bound,
                                dtype=jnp.float32)
    bias = jax.random.uniform(k_b, (1, 1), minval=-bound, maxval=bound,
                              dtype=jnp.float32)

    # Path A: single-pass VMEM-resident slab.
    ctx, scores = attention_layer(hidden_states, weight, bias)
    jax.block_until_ready((ctx, scores))
    ctx_r, scores_r = attention_layer_ref(hidden_states, weight, bias)
    assert jnp.allclose(ctx, ctx_r, atol=1e-4, rtol=1e-4)
    assert jnp.allclose(scores, scores_r, atol=1e-4, rtol=1e-4)

    # Path A with many prefix-sum sub-blocks (exercises the in-place fori_loop scan).
    S2 = 72
    hs2 = jax.random.normal(k_x2, (B, S2, H), dtype=jnp.float32)
    ctx2, scores2 = attention_layer(hs2, weight, bias)
    jax.block_until_ready((ctx2, scores2))
    ctx2_r, scores2_r = attention_layer_ref(hs2, weight, bias)
    assert jnp.allclose(ctx2, ctx2_r, atol=1e-4, rtol=1e-4)
    assert jnp.allclose(scores2, scores2_r, atol=1e-4, rtol=1e-4)

    # Path B: two-pass tiled (forced via seq_tile) — logits cache + running carry.
    S3 = 16
    hs3 = jax.random.normal(k_x3, (B, S3, H), dtype=jnp.float32)
    ctx3, scores3 = attention_layer(hs3, weight, bias, seq_tile=8)
    jax.block_until_ready((ctx3, scores3))
    ctx3_r, scores3_r = attention_layer_ref(hs3, weight, bias)
    assert jnp.allclose(ctx3, ctx3_r, atol=1e-4, rtol=1e-4)
    assert jnp.allclose(scores3, scores3_r, atol=1e-4, rtol=1e-4)

    print("KERNEL_OK")
</pallas_src>

<mosaic_0001>
module attributes {stable_mosaic.version = 11 : i64} {
  func.func @_single_pass_kernel(%arg0: i32, %arg1: memref<1x8x32xf32, #tpu.memory_space<vmem>>, %arg2: memref<1x32xf32, #tpu.memory_space<vmem>>, %arg3: memref<1xf32, #tpu.memory_space<smem>>, %arg4: memref<1x8x32xf32, #tpu.memory_space<vmem>>, %arg5: memref<1x8x1xf32, #tpu.memory_space<vmem>>) attributes {dimension_semantics = [#tpu.dimension_semantics<parallel>], iteration_bounds = array<i64: 2>, scalar_prefetch = 0 : i64, scratch_operands = 0 : i64, tpu.core_type = #tpu.core_type<tc>, window_params = [{transform_indices = @transform_0, window_bounds = array<i64: 1, 8, 32>}, {pipeline_mode = #tpu.pipeline_mode<synchronous>, transform_indices = @transform_1, window_bounds = array<i64: 1, 32>}, {transform_indices = @transform_2, window_bounds = array<i64: 1>}, {transform_indices = @transform_3, window_bounds = array<i64: 1, 8, 32>}, {transform_indices = @transform_4, window_bounds = array<i64: 1, 8, 1>}]} {
    %c0 = arith.constant 0 : index
    %c0_0 = arith.constant 0 : index
    %c0_1 = arith.constant 0 : index
    %0 = vector.load %arg1[%c0, %c0_0, %c0_1] : memref<1x8x32xf32, #tpu.memory_space<vmem>>, vector<1x8x32xf32>
    %1 = vector.shape_cast %0 : vector<1x8x32xf32> to vector<8x32xf32>
    %c0_2 = arith.constant 0 : index
    %c0_3 = arith.constant 0 : index
    %2 = vector.load %arg2[%c0_2, %c0_3] : memref<1x32xf32, #tpu.memory_space<vmem>>, vector<1x32xf32>
    %c0_4 = arith.constant 0 : index
    %3 = memref.load %arg3[%c0_4] : memref<1xf32, #tpu.memory_space<smem>>
    %4 = vector.broadcast %2 : vector<1x32xf32> to vector<8x32xf32>
    %5 = arith.mulf %1, %4 : vector<8x32xf32>
    %cst = arith.constant dense<0.000000e+00> : vector<8xf32>
    %6 = vector.multi_reduction <add>, %5, %cst [1] : vector<8x32xf32> to vector<8xf32>
    %7 = vector.shape_cast %6 : vector<8xf32> to vector<8x1xf32>
    %8 = vector.broadcast %3 : f32 to vector<8x1xf32>
    %9 = arith.addf %7, %8 : vector<8x1xf32>
    %cst_5 = arith.constant dense<0xFF800000> : vector<1xf32>
    %10 = vector.multi_reduction <maximumf>, %9, %cst_5 [0] : vector<8x1xf32> to vector<1xf32>
    %11 = vector.shape_cast %10 : vector<1xf32> to vector<1x1xf32>
    %12 = vector.broadcast %11 : vector<1x1xf32> to vector<8x1xf32>
    %13 = arith.subf %9, %12 : vector<8x1xf32>
    %14 = math.exp %13 : vector<8x1xf32>
    %cst_6 = arith.constant dense<0.000000e+00> : vector<1xf32>
    %15 = vector.multi_reduction <add>, %14, %cst_6 [0] : vector<8x1xf32> to vector<1xf32>
    %16 = vector.shape_cast %15 : vector<1xf32> to vector<1x1xf32>
    %17 = math.log %16 : vector<1x1xf32>
    %18 = arith.addf %11, %17 : vector<1x1xf32>
    %19 = vector.broadcast %18 : vector<1x1xf32> to vector<8x1xf32>
    %20 = arith.subf %9, %19 : vector<8x1xf32>
    %21 = math.exp %20 : vector<8x1xf32>
    %22 = vector.broadcast %21 : vector<8x1xf32> to vector<8x32xf32>
    %23 = arith.mulf %22, %1 : vector<8x32xf32>
    %24 = tpu.iota {dimensions = array<i32: 0>} : vector<8x8xi32>
    %25 = tpu.iota {dimensions = array<i32: 1>} : vector<8x8xi32>
    %26 = arith.cmpi sle, %25, %24 : vector<8x8xi32>
    %27 = arith.extui %26 : vector<8x8xi1> to vector<8x8xi32>
    %28 = arith.sitofp %27 : vector<8x8xi32> to vector<8x8xf32>
    %cst_7 = arith.constant 0.000000e+00 : f32
    %29 = vector.broadcast %cst_7 : f32 to vector<1x32xf32>
    %cst_8 = arith.constant dense<0.000000e+00> : vector<8x32xf32>
    %30 = tpu.matmul %28, %23, %cst_8 {dimension_numbers = #tpu.dot_dimension_numbers<[1], [0], [0], [1], [0, 0, 1, 1], [], []>} : vector<8x8xf32>, vector<8x32xf32>, vector<8x32xf32> -> vector<8x32xf32>
    %31 = vector.broadcast %29 : vector<1x32xf32> to vector<8x32xf32>
    %32 = arith.addf %30, %31 : vector<8x32xf32>
    %c0_9 = arith.constant 0 : index
    %c0_10 = arith.constant 0 : index
    %c0_11 = arith.constant 0 : index
    %33 = vector.load %arg4[%c0_9, %c0_10, %c0_11] : memref<1x8x32xf32, #tpu.memory_space<vmem>>, vector<1x8x32xf32>
    %34 = vector.shape_cast %33 : vector<1x8x32xf32> to vector<8x32xf32>
    %35 = vector.shape_cast %32 : vector<8x32xf32> to vector<1x8x32xf32>
    tpu.vector_store %arg4[%c0_9, %c0_10, %c0_11], %35 {strides = array<i32>} : memref<1x8x32xf32, #tpu.memory_space<vmem>>, vector<1x8x32xf32>,
    %c0_12 = arith.constant 0 : index
    %c0_13 = arith.constant 0 : index
    %c0_14 = arith.constant 0 : index
    %36 = vector.load %arg5[%c0_12, %c0_13, %c0_14] : memref<1x8x1xf32, #tpu.memory_space<vmem>>, vector<1x8x1xf32>
    %37 = vector.shape_cast %36 : vector<1x8x1xf32> to vector<8x1xf32>
    %38 = vector.shape_cast %21 : vector<8x1xf32> to vector<1x8x1xf32>
    tpu.vector_store %arg5[%c0_12, %c0_13, %c0_14], %38 {strides = array<i32>} : memref<1x8x1xf32, #tpu.memory_space<vmem>>, vector<1x8x1xf32>,
    return
  }
  func.func @transform_0(%arg0: i32) -> (i32, i32, i32) {
    %c0_i32 = arith.constant 0 : i32
    %c0_i32_0 = arith.constant 0 : i32
    %c0_i32_1 = arith.constant 0 : i32
    return %arg0, %c0_i32, %c0_i32_0 : i32, i32, i32
  }
  func.func @transform_1(%arg0: i32) -> (i32, i32) {
    %c0_i32 = arith.constant 0 : i32
    %c0_i32_0 = arith.constant 0 : i32
    %c0_i32_1 = arith.constant 0 : i32
    return %c0_i32, %c0_i32_0 : i32, i32
  }
  func.func @transform_2(%arg0: i32) -> i32 {
    %c0_i32 = arith.constant 0 : i32
    %c0_i32_0 = arith.constant 0 : i32
    return %c0_i32 : i32
  }
  func.func @transform_3(%arg0: i32) -> (i32, i32, i32) {
    %c0_i32 = arith.constant 0 : i32
    %c0_i32_0 = arith.constant 0 : i32
    %c0_i32_1 = arith.constant 0 : i32
    return %arg0, %c0_i32, %c0_i32_0 : i32, i32, i32
  }
  func.func @transform_4(%arg0: i32) -> (i32, i32, i32) {
    %c0_i32 = arith.constant 0 : i32
    %c0_i32_0 = arith.constant 0 : i32
    %c0_i32_1 = arith.constant 0 : i32
    return %arg0, %c0_i32, %c0_i32_0 : i32, i32, i32
  }
}

</mosaic_0001>

<llo_original>
// kernel: tpu_custom_call.1
$region0: #{tpu_custom_call.1}
  #allocation0 [shape = 'u32[]', space=smem, size = 0x4, offset = 0x4, fixed_abs, tag = 'smem constant byte address 0x4 - core index']
  #allocation1 [shape = 'u32[72,128]{1,0:T(1,128)}', space=vmem, size = 0x9000, scoped, tag = 'internal scratch']
  #allocation2 [shape = 'f32[1]{0:T(128)S(6)}', space=smem, size = 0x200, scoped, tag = 'scoped memory for tpu_custom_call.1']
  %s0 = inlined_call_operand.hbm [shape: f32[2,8,32], index: 0, kind: input, shape index: {}]
  %s1 = inlined_call_operand.vmem [shape: f32[1,32], index: 1, kind: input, shape index: {}]
  %s2 = inlined_call_operand.<no memory space> [shape: f32[1], index: 2, kind: input, shape index: {}]
  %s3 = inlined_call_operand.hbm [shape: f32[2,8,32], index: 3, kind: output, shape index: {0}]
  %s4 = inlined_call_operand.vmem [shape: f32[2,8,1], index: 4, kind: output, shape index: {1}]
  %5 = xla_tuple %s3, %s4
  %s6 = sld [smem:[#allocation0]]
  $region57: #{tpu_custom_call.1} parent=0
    _
  %s8 = ssub.s32 1, %s6
  %s9 = scalar_select 0, %s8, %s6
  %10 = sst [smem:[#allocation2]] %s2
  $region1: #{tpu_custom_call.1} parent=0
    #allocation3 [shape = 'u8[8192]{0}', space=vmem, size = 0x2000, scoped, tag = 'input window, operand 0']
    #allocation4 [shape = 's32[2]{0}', space=sflag, size = 0x8, scoped, tag = 'scoped memory for tpu_custom_call.1']
    #allocation5 [shape = 's32[2]{0}', space=sflag, size = 0x8, scoped, tag = 'scoped memory for tpu_custom_call.1']
    #allocation6 [shape = 'u8[8192]{0}', space=vmem, size = 0x2000, scoped, tag = 'output window, operand 0']
    %11 = vsyncpa [#allocation4], 0
    %s12 = scalar_lea.sflag [#allocation4], 1
    %13 = vsyncpa %s12, 0
    %14 = vsyncpa [#allocation5], 0
    %s15 = scalar_lea.sflag [#allocation5], 1
    %16 = vsyncpa %s15, 0
    loop: start=0, step=1, limit=4
    $region2: #{tpu_custom_call.1} parent=1 // loop_pre_header
      _
    $region3: #{tpu_custom_call.1} parent=1 // loop_header
      %s18 = sphi 0, %s22
      %p19 = scmp.ge.s32.totalorder %s18, 4
      %s28 = sphi 0, %s30
      %s31 = sphi 0, %s28
      %s32 = sphi 0, %s31
      %s48 = sphi 0, %s32
      %s52 = sphi 0, %s52
      %s54 = sphi 0, %s52
      %s55 = sphi 0, %s54
      %s69 = sphi 0, %s55
      %s73 = sphi 0, %s73
      %s75 = sphi 0, %s73
      %s76 = sphi 0, %s75
      %s90 = sphi 0, %s76
      %s96 = sphi 0, %s98
      %s99 = sphi 0, %s96
      %s100 = sphi 0, %s99
      %s116 = sphi 0, %s100
      %s122 = sphi 0, %s124
      %s125 = sphi 0, %s122
      %s126 = sphi 0, %s125
      %s142 = sphi 0, %s126
    $region4: #{tpu_custom_call.1} parent=1 // loop_header_branch
      %21 = sbr.rel (%p19) target = $region8
    $region5: #{tpu_custom_call.1} parent=1 // loop_body
      %s23 = ssub.s32 %s18, 1
      %s24 = ssub.s32 %s18, 2
      %s25 = sadd.s32 %s18, 1
      %s26 = ssub.s32 %s18, %s25
      %p27 = scmp.eq.s32.totalorder %s26, 0
      %s29 = sadd.s32 %s28, 1
      %s30 = scalar_select %p27, %s28, %s29
      %p33 = pneg %p27
      %p34 = scmp.eq.s32.totalorder %s18, 1
      %p35 = por %p33, %p34
      %p36 = scmp.ne.s32.totalorder %s28, %s31
      %p37 = scmp.eq.s32.totalorder %s18, 0
      %p38 = por %p36, %p37
      %p39 = scmp.ne.s32.totalorder %s28, %s31
      %p40 = scmp.eq.s32.totalorder %s23, 1
      %p41 = por %p39, %p40
      %p42 = scmp.ne.s32.totalorder %s31, %s32
      %p43 = scmp.eq.s32.totalorder %s23, 0
      %p44 = por %p42, %p43
      %p45 = scmp.ne.s32.totalorder %s31, %s32
      %p46 = scmp.eq.s32.totalorder %s24, 1
      %p47 = por %p45, %p46
      %p49 = scmp.ne.s32.totalorder %s32, %s48
      %p50 = scmp.eq.s32.totalorder %s24, 0
      %p51 = por %p49, %p50
      %s53 = sadd.s32 %s52, 1
      %p56 = scmp.eq.s32.totalorder %s18, 1
      %p57 = scmp.ne.s32.totalorder %s52, %s54
      %p58 = scmp.eq.s32.totalorder %s18, 0
      %p59 = por %p57, %p58
      %p60 = scmp.ne.s32.totalorder %s52, %s54
      %p61 = scmp.eq.s32.totalorder %s23, 1
      %p62 = por %p60, %p61
      %p63 = scmp.ne.s32.totalorder %s54, %s55
      %p64 = scmp.eq.s32.totalorder %s23, 0
      %p65 = por %p63, %p64
      %p66 = scmp.ne.s32.totalorder %s54, %s55
      %p67 = scmp.eq.s32.totalorder %s24, 1
      %p68 = por %p66, %p67
      %p70 = scmp.ne.s32.totalorder %s55, %s69
      %p71 = scmp.eq.s32.totalorder %s24, 0
      %p72 = por %p70, %p71
      %s74 = sadd.s32 %s73, 1
      %p77 = scmp.eq.s32.totalorder %s18, 1
      %p78 = scmp.ne.s32.totalorder %s73, %s75
      %p79 = scmp.eq.s32.totalorder %s18, 0
      %p80 = por %p78, %p79
      %p81 = scmp.ne.s32.totalorder %s73, %s75
      %p82 = scmp.eq.s32.totalorder %s23, 1
      %p83 = por %p81, %p82
      %p84 = scmp.ne.s32.totalorder %s75, %s76
      %p85 = scmp.eq.s32.totalorder %s23, 0
      %p86 = por %p84, %p85
      %p87 = scmp.ne.s32.totalorder %s75, %s76
      %p88 = scmp.eq.s32.totalorder %s24, 1
      %p89 = por %p87, %p88
      %p91 = scmp.ne.s32.totalorder %s76, %s90
      %p92 = scmp.eq.s32.totalorder %s24, 0
      %p93 = por %p91, %p92
      %s94 = ssub.s32 %s18, %s25
      %p95 = scmp.eq.s32.totalorder %s94, 0
      %s97 = sadd.s32 %s96, 1
      %s98 = scalar_select %p95, %s96, %s97
      %p101 = pneg %p95
      %p102 = scmp.eq.s32.totalorder %s18, 1
      %p103 = por %p101, %p102
      %p104 = scmp.ne.s32.totalorder %s96, %s99
      %p105 = scmp.eq.s32.totalorder %s18, 0
      %p106 = por %p104, %p105
      %p107 = scmp.ne.s32.totalorder %s96, %s99
      %p108 = scmp.eq.s32.totalorder %s23, 1
      %p109 = por %p107, %p108
      %p110 = scmp.ne.s32.totalorder %s99, %s100
      %p111 = scmp.eq.s32.totalorder %s23, 0
      %p112 = por %p110, %p111
      %p113 = scmp.ne.s32.totalorder %s99, %s100
      %p114 = scmp.eq.s32.totalorder %s24, 1
      %p115 = por %p113, %p114
      %p117 = scmp.ne.s32.totalorder %s100, %s116
      %p118 = scmp.eq.s32.totalorder %s24, 0
      %p119 = por %p117, %p118
      %s120 = ssub.s32 %s18, %s25
      %p121 = scmp.eq.s32.totalorder %s120, 0
      %s123 = sadd.s32 %s122, 1
      %s124 = scalar_select %p121, %s122, %s123
      %p127 = pneg %p121
      %p128 = scmp.eq.s32.totalorder %s18, 1
      %p129 = por %p127, %p128
      %p130 = scmp.ne.s32.totalorder %s122, %s125
      %p131 = scmp.eq.s32.totalorder %s18, 0
      %p132 = por %p130, %p131
      %p133 = scmp.ne.s32.totalorder %s122, %s125
      %p134 = scmp.eq.s32.totalorder %s23, 1
      %p135 = por %p133, %p134
      %p136 = scmp.ne.s32.totalorder %s125, %s126
      %p137 = scmp.eq.s32.totalorder %s23, 0
      %p138 = por %p136, %p137
      %p139 = scmp.ne.s32.totalorder %s125, %s126
      %p140 = scmp.eq.s32.totalorder %s24, 1
      %p141 = por %p139, %p140
      %p143 = scmp.ne.s32.totalorder %s126, %s142
      %p144 = scmp.eq.s32.totalorder %s24, 0
      %p145 = por %p143, %p144
      %p146 = scmp.le.s32.totalorder 1, %s18
      %p147 = scmp.lt.s32.totalorder %s18, 3
      %p148 = pnand %p146, %p147
      %p149 = pneg %p148
      // Predicated region
      $region9: #{tpu_custom_call.1} parent=5 // pred_check
        _
      $region10: #{tpu_custom_call.1} parent=5 // pred_check_branch
        %151 = sbr.rel (%p148) target = $region12
      $region11: #{tpu_custom_call.1} parent=5 // pred_region
        %s152 = ssub.s32 %s18, 1
        // Predicated region
        $region13: #{tpu_custom_call.1} parent=11 // pred_check
          %p153 = pneg %p65
        $region14: #{tpu_custom_call.1} parent=11 // pred_check_branch
          %155 = sbr.rel (%p153) target = $region16
        $region15: #{tpu_custom_call.1} parent=11 // pred_region
          _
        $region16: #{tpu_custom_call.1} parent=11 // pred_fallthru
          _
        // Predicated region
        $region17: #{tpu_custom_call.1} parent=11 // pred_check
          %p156 = pneg %p86
        $region18: #{tpu_custom_call.1} parent=11 // pred_check_branch
          %158 = sbr.rel (%p156) target = $region20
        $region19: #{tpu_custom_call.1} parent=11 // pred_region
          _
        $region20: #{tpu_custom_call.1} parent=11 // pred_fallthru
          _
      $region12: #{tpu_custom_call.1} parent=5 // pred_fallthru
        _
      %p159 = scmp.lt.s32.totalorder %s18, 2
      // Predicated region
      $region21: #{tpu_custom_call.1} parent=5 // pred_check
        %p160 = pneg %p159
      $region22: #{tpu_custom_call.1} parent=5 // pred_check_branch
        %162 = sbr.rel (%p160) target = $region24
      $region23: #{tpu_custom_call.1} parent=5 // pred_region
        // Predicated region
        $region25: #{tpu_custom_call.1} parent=23 // pred_check
          %p163 = pneg %p38
        $region26: #{tpu_custom_call.1} parent=23 // pred_check_branch
          %165 = sbr.rel (%p163) target = $region28
        $region27: #{tpu_custom_call.1} parent=23 // pred_region
          %s166 = sand.u32 %s28, 1
          %s167 = scalar_lea.sflag [#allocation4], %s166
          %s168 = sand.u32 %s28, 1
          %s169 = smul.addr %s168, 8
          %s170 = scalar_lea.vmem [#allocation3], %s169
          %172 = vsyncadd %s167, 0
          %s173 = smul.addr %s18, 8
          %s174 = scalar_lea.hbm %s0, %s173
          %s176 = sshll.u32 %s174, 4
          %s177 = int_to_ptr.hbm [resolvable:$true] %s176
          %s178 = sshll.u32 %s170, 4
          %s179 = int_to_ptr.vmem [resolvable:$true] %s178
          %181 = dma.hbm_to_vmem [thread:$0]  %s177, 128, %s179, %s167
        $region28: #{tpu_custom_call.1} parent=23 // pred_fallthru
          _
      $region24: #{tpu_custom_call.1} parent=5 // pred_fallthru
        _
      %p182 = scmp.le.s32.totalorder 1, %s18
      %p183 = scmp.lt.s32.totalorder %s18, 3
      %p184 = pnand %p182, %p183
      %p185 = pneg %p184
      // Predicated region
      $region29: #{tpu_custom_call.1} parent=5 // pred_check
        _
      $region30: #{tpu_custom_call.1} parent=5 // pred_check_branch
        %187 = sbr.rel (%p184) target = $region32
      $region31: #{tpu_custom_call.1} parent=5 // pred_region
        %s188 = ssub.s32 %s18, 1
        %s189 = sand.u32 %s31, 1
        %s190 = scalar_lea.sflag [#allocation4], %s189
        %s191 = sand.u32 %s31, 1
        %s192 = smul.addr %s191, 8
        %s193 = scalar_lea.vmem [#allocation3], %s192
        // Predicated region
        $region33: #{tpu_custom_call.1} parent=31 // pred_check
          %p194 = pneg %p44
        $region34: #{tpu_custom_call.1} parent=31 // pred_check_branch
          %196 = sbr.rel (%p194) target = $region36
        $region35: #{tpu_custom_call.1} parent=31 // pred_region
          %198 = dma.done %s190, 128
        $region36: #{tpu_custom_call.1} parent=31 // pred_fallthru
          _
        %s199 = sand.u32 %s31, 1
        %s200 = scalar_lea.sflag [#allocation4], %s199
        %s201 = sand.u32 %s31, 1
        %s202 = smul.addr %s201, 8
        %s203 = scalar_lea.vmem [#allocation3], %s202
        %p204 = pneg %p44
        %p205 = pneg %p41
        %p206 = pneg %p65
        %p207 = pneg %p62
        %p208 = pneg %p86
        %p209 = pneg %p83
        %p210 = pneg %p112
        %p211 = pneg %p109
        %s212 = sand.u32 %s99, 1
        %s213 = scalar_lea.sflag [#allocation5], %s212
        %s214 = sand.u32 %s99, 1
        %s215 = smul.addr %s214, 8
        %s216 = scalar_lea.vmem [#allocation6], %s215
        %p217 = pneg %p138
        %p218 = pneg %p135
        %p219 = scmp.lt.s32.totalorder %s23, 1
        %s220 = scalar_select %p219, %s23, 1
        %s221 = smul.addr %s220, 8
        %s222 = scalar_lea.vmem %s4, %s221
        %p223 = scmp.lt.s32.totalorder %s23, 1
        %s224 = scalar_select %p223, %s23, 1
        %s225 = smul.addr %s224, 8
        %s226 = scalar_lea.vmem %s4, %s225
        %v227 = vld [vmem:[%s193] sm:$0xff]
        %v228 = vld [vmem:[%s1] sm:$0x1]
        %s229 = sld [smem:[#allocation2]]
        %v231 = vperm.slane %v228, 0
        %v233 = vmul.f32 %v227, %v231
        %vm234 = vcmask 261120
        %v235 = vsel %vm234, %v233, 0.0
        %236 = vadd.xlane.f32.xlu0 %v235
        %v237 = vpop.xlane.xlu0 %236
        %v238 = vstv %s229
        %v239 = vadd.f32 %v237, %v238
        %v240 = vrot.slane %v239, 4
        %v241 = vmax.f32 %v239, %v240
        %v242 = vrot.slane %v241, 2
        %v243 = vmax.f32 %v241, %v242
        %v244 = vrot.slane %v243, 1
        %v245 = vmax.f32 %v243, %v244
        %v246 = vsub.f32 %v239, %v245
        %v247 = vmul.f32 %v246, 1.442695
        %v248 = vpow.pop %v247
        %v249 = vrot.slane %v248, 4
        %v250 = vadd.f32 %v248, %v249
        %v251 = vrot.slane %v250, 2
        %v252 = vadd.f32 %v250, %v251
        %v253 = vrot.slane %v252, 1
        %v254 = vadd.f32 %v252, %v253
        %v255 = vlog2.pop %v254
        %v256 = vmul.f32 %v255, 0.6931472
        %v257 = vadd.f32 %v245, %v256
        %v258 = vsub.f32 %v239, %v257
        %v259 = vmul.f32 %v258, 1.442695
        %v260 = vpow.pop %v259
        %v261 = vmul.f32 %v260, %v227
        %v262 = vlaneseq
        %v263 = vshrl.u32 %v262, 7
        %v264 = vlaneseq
        %v265 = vand.u32 %v264, 127
        %vm266 = vcmp.le.s32.totalorder %v265, %v263
        %v267 = vsel %vm266, 1, 0
        %v268 = vcvt.s32.f32 %v267
        %vm269 = vcmask 64512
        %v271 = vsel %vm269, %v268, 0
        %273 = vmatpush.msra.mxu0 0.0
        %274 = vmatpush.msra.mxu0 0.0
        %275 = vmatpush.msra.mxu0 0.0
        %276 = vmatpush.msra.mxu0 0.0
        %277 = vmatpush.msra.mxu0 0.0
        %278 = vmatpush.msra.mxu0 0.0
        %279 = vmatpush.msra.mxu0 0.0
        %280 = vmatpush.msra.mxu0 0.0
        %281 = vmatpush.msra.mxu0 0.0
        %282 = vmatpush.msra.mxu0 0.0
        %283 = vmatpush.msra.mxu0 0.0
        %284 = vmatpush.msra.mxu0 0.0
        %285 = vmatpush.msra.mxu0 0.0
        %286 = vmatpush.msra.mxu0 0.0
        %287 = vmatpush.msra.mxu0 0.0
        %288 = vmatpush.msra.mxu0 %v261
        %289 = vmatmul.f32.gmra.mxu0 %v271
        %v290 = vpop.f32.mrf.mxu0
        %v291 = vadd.f32 0.0, %v290
        %292 = vdwg.mxu0
        %293 = vst.msk [vmem:[%s216] sm:$0xff] %vm234, %v291
        %vm294 = vcmask 7168
        %295 = vst.msk [vmem:[%s226] sm:$0xff] %vm294, %v260
        %s296 = sand.u32 %s99, 1
        %s297 = scalar_lea.sflag [#allocation5], %s296
        %s298 = sand.u32 %s99, 1
        %s299 = smul.addr %s298, 8
        %s300 = scalar_lea.vmem [#allocation6], %s299
        %p301 = scmp.lt.s32.totalorder %s23, 1
        %s302 = scalar_select %p301, %s23, 1
        %s303 = smul.addr %s302, 8
        %s304 = scalar_lea.vmem %s4, %s303
        // Predicated region
        $region37: #{tpu_custom_call.1} parent=31 // pred_check
          %p305 = pneg %p109
        $region38: #{tpu_custom_call.1} parent=31 // pred_check_branch
          %307 = sbr.rel (%p305) target = $region40
        $region39: #{tpu_custom_call.1} parent=31 // pred_region
          %309 = vsyncadd %s297, 0
          %s310 = smul.addr %s23, 8
          %s311 = scalar_lea.hbm %s3, %s310
          %s313 = sshll.u32 %s300, 4
          %s314 = int_to_ptr.vmem [resolvable:$true] %s313
          %s315 = sshll.u32 %s311, 4
          %s316 = int_to_ptr.hbm [resolvable:$true] %s315
          %318 = dma.vmem_to_hbm [thread:$0]  %s314, 128, %s316, %s297
        $region40: #{tpu_custom_call.1} parent=31 // pred_fallthru
          _
        // Predicated region
        $region41: #{tpu_custom_call.1} parent=31 // pred_check
          %p319 = pneg %p135
        $region42: #{tpu_custom_call.1} parent=31 // pred_check_branch
          %321 = sbr.rel (%p319) target = $region44
        $region43: #{tpu_custom_call.1} parent=31 // pred_region
          _
        $region44: #{tpu_custom_call.1} parent=31 // pred_fallthru
          _
      $region32: #{tpu_custom_call.1} parent=5 // pred_fallthru
        _
      %p322 = scmp.le.s32.totalorder 2, %s18
      // Predicated region
      $region45: #{tpu_custom_call.1} parent=5 // pred_check
        %p323 = pneg %p322
      $region46: #{tpu_custom_call.1} parent=5 // pred_check_branch
        %325 = sbr.rel (%p323) target = $region48
      $region47: #{tpu_custom_call.1} parent=5 // pred_region
        %s326 = ssub.s32 %s18, 2
        // Predicated region
        $region49: #{tpu_custom_call.1} parent=47 // pred_check
          %p327 = pneg %p115
        $region50: #{tpu_custom_call.1} parent=47 // pred_check_branch
          %329 = sbr.rel (%p327) target = $region52
        $region51: #{tpu_custom_call.1} parent=47 // pred_region
          %s330 = sand.u32 %s100, 1
          %s331 = scalar_lea.sflag [#allocation5], %s330
          %s332 = sand.u32 %s100, 1
          %s333 = smul.addr %s332, 8
          %s334 = scalar_lea.vmem [#allocation6], %s333
          %336 = dma.done %s331, 128
        $region52: #{tpu_custom_call.1} parent=47 // pred_fallthru
          _
        // Predicated region
        $region53: #{tpu_custom_call.1} parent=47 // pred_check
          %p337 = pneg %p141
        $region54: #{tpu_custom_call.1} parent=47 // pred_check_branch
          %339 = sbr.rel (%p337) target = $region56
        $region55: #{tpu_custom_call.1} parent=47 // pred_region
          %p340 = scmp.lt.s32.totalorder %s24, 1
          %s341 = scalar_select %p340, %s24, 1
          %s342 = smul.addr %s341, 8
          %s343 = scalar_lea.vmem %s4, %s342
        $region56: #{tpu_custom_call.1} parent=47 // pred_fallthru
          _
      $region48: #{tpu_custom_call.1} parent=5 // pred_fallthru
        _
    $region6: #{tpu_custom_call.1} parent=1 // loop_footer
      %s22 = sadd.s32 1, %s18
    $region7: #{tpu_custom_call.1} parent=1 // loop_footer_branch
      %17 = sbr.rel target = $region3
    $region8: #{tpu_custom_call.1} parent=1 // loop_exit
      _
    %344 = vsyncpa [#allocation4], 1
    %s345 = scalar_lea.sflag [#allocation4], 1
    %346 = vsyncpa %s345, 1
    %347 = vsyncpa [#allocation5], 1
    %s348 = scalar_lea.sflag [#allocation5], 1
    %349 = vsyncpa %s348, 1

</llo_original>
